<compile_context>
chip_gen: v5e
topology: v5e:2x2
jax: 0.10.0
libtpu: 0.0.40
codegen_flags: <defaults>
</compile_context>

<pallas_src>
import functools

import jax
import jax.numpy as jnp
from jax.experimental import pallas as pl
from jax.experimental.pallas import tpu as pltpu

V = 64            # output_size (vocabulary)
H = 32            # hidden_size (direction = 1 -> GRU hidden size = H)
L = 8             # max_length
T = 4             # decode steps executed inside a single kernel call
KA = 2 * H + 8    # fused emb/h projection contraction (+8: bias lane + pad)
KG = H + 8        # GRU-input / out-proj contraction (+8: bias lane + pad)
OUT_W = 128       # packed per-step output row: [logp(V) | h(H) | attn_w(L) | pad]
W_LANES = 4 * 128 # weight slab lanes: [A_e(128) | A_h(128) | G(128) | O(128)]


def _attn_decoder_kernel(toks_ref, emb_ref, w_ref, state_ref, out_ref, h_scr):
    """One grid step == one decode step. Weights/state resident, hidden carried."""
    del toks_ref  # tokens only drive the embedding-row index_map
    t = pl.program_id(0)
    dot = functools.partial(jnp.dot, preferred_element_type=jnp.float32)

    @pl.when(t == 0)
    def _():
        h_scr[...] = state_ref[L:L + 1, :]          # initial hidden (row L of state)

    emb = emb_ref[0]                                # (1, H) embedding row (pipelined DMA)
    h = h_scr[...]                                  # (1, H) carried hidden state
    enc_proj = state_ref[0:L, :]                    # (L, H) = encoder_outputs @ wc_a

    # constant bias lane [1, 0, ..., 0]: picks up the bias rows baked into w_ref
    one = (jax.lax.broadcasted_iota(jnp.int32, (1, 8), 1) == 0).astype(jnp.float32)

    # --- fused projection: [emb | h | 1] @ W_A -> [e_proj(128) | h_proj(128)] ---
    eh = dot(jnp.concatenate([emb, h, one], axis=1), w_ref[:, 0:256])      # (1, 256)
    e_proj = eh[:, 0:128]     # [emb@wa_e + ba | emb@wc_e + bc | pad]
    h_proj = eh[:, 128:256]   # [h@wa_h | h@whr | h@whz | h@whn + bhn | pad]

    # --- attention softmax over max_length ---
    logits_a = e_proj[:, 0:L] + h_proj[:, 0:L]
    m = jnp.max(logits_a, axis=1, keepdims=True)
    ea = jnp.exp(logits_a - m)
    attn_w = ea * pl.reciprocal(jnp.sum(ea, axis=1, keepdims=True), approx=True)

    # --- attn_combine + ReLU (reassociated: attn_w @ (enc @ wc_a)) ---
    x = jnp.maximum(e_proj[:, L:L + H] + dot(attn_w, enc_proj), 0.0)       # (1, H)

    # --- one GRU step (input-side gates fused, biases folded into the slab) ---
    gx = dot(jnp.concatenate([x, one], axis=1), w_ref[0:KG, 256:384])      # (1, 128)
    r = jax.nn.sigmoid(gx[:, 0:H] + h_proj[:, L:L + H])
    z = jax.nn.sigmoid(gx[:, H:2 * H] + h_proj[:, L + H:L + 2 * H])
    n = jnp.tanh(gx[:, 2 * H:3 * H] + r * h_proj[:, L + 2 * H:L + 3 * H])
    h_new = (1.0 - z) * n + z * h                                          # (1, H)
    h_scr[...] = h_new

    # --- out projection + LogSoftmax(dim=1) ---
    lo = dot(jnp.concatenate([h_new, one], axis=1), w_ref[0:KG, 384:512])  # (1, 128)
    logits = lo[:, 0:V]
    lm = jnp.max(logits, axis=1, keepdims=True)
    lse = jnp.log(jnp.sum(jnp.exp(logits - lm), axis=1, keepdims=True)) + lm

    # one lane-dense 128-wide row per step into the resident (T, 128) output
    out_ref[pl.ds(t, 1), :] = jnp.concatenate(
        [logits - lse, h_new, attn_w,
         jnp.zeros((1, OUT_W - (V + H + L)), jnp.float32)], axis=1)


def init_params(key):
    ks = jax.random.split(key, 21)
    nrm = lambda k, shp: (0.1 * jax.random.normal(k, shp)).astype(jnp.float32)
    return {
        "emb":  nrm(ks[0], (V, H)),
        # attn: Linear(2H, L), split into embedded / hidden halves
        "wa_e": nrm(ks[1], (H, L)), "wa_h": nrm(ks[2], (H, L)), "ba": nrm(ks[3], (1, L)),
        # attn_combine: Linear(2H, H), split into embedded / attn_applied halves
        "wc_e": nrm(ks[4], (H, H)), "wc_a": nrm(ks[5], (H, H)), "bc": nrm(ks[6], (1, H)),
        # GRU(H, H) gates (r, z, n), stored (in, out)
        "wir": nrm(ks[7], (H, H)),  "wiz": nrm(ks[8], (H, H)),  "win": nrm(ks[9], (H, H)),
        "whr": nrm(ks[10], (H, H)), "whz": nrm(ks[11], (H, H)), "whn": nrm(ks[12], (H, H)),
        "bir": nrm(ks[13], (1, H)), "biz": nrm(ks[14], (1, H)), "bin": nrm(ks[15], (1, H)),
        "bhr": nrm(ks[16], (1, H)), "bhz": nrm(ks[17], (1, H)), "bhn": nrm(ks[18], (1, H)),
        # out: Linear(H, V)
        "wo": nrm(ks[19], (H, V)), "bo": nrm(ks[20], (1, V)),
    }


def pack_weights(p):
    """One (KA, 512) f32 slab. Lane groups of 128:
         lanes   0:128  e-side of fused proj : [wa_e | wc_e | 0]      rows 0:H, bias row 2H
         lanes 128:256  h-side of fused proj : [wa_h | whr|whz|whn]   rows H:2H, bias row 2H
         lanes 256:384  GRU input gates      : [wir | wiz | win | 0]  rows 0:H, bias row H
         lanes 384:512  out projection       : [wo | 0]               rows 0:H, bias row H
       Bias rows are picked up by the constant-1 lane appended to each matmul LHS,
       so no separate bias input / bias adds in the kernel."""
    s = jnp.zeros((KA, W_LANES), jnp.float32)
    # fused projection, e-side
    s = s.at[0:H, 0:L].set(p["wa_e"])
    s = s.at[0:H, L:L + H].set(p["wc_e"])
    s = s.at[2 * H, 0:L].set(p["ba"][0])
    s = s.at[2 * H, L:L + H].set(p["bc"][0])
    # fused projection, h-side
    s = s.at[H:2 * H, 128:128 + L].set(p["wa_h"])
    s = s.at[H:2 * H, 128 + L:128 + L + H].set(p["whr"])
    s = s.at[H:2 * H, 128 + L + H:128 + L + 2 * H].set(p["whz"])
    s = s.at[H:2 * H, 128 + L + 2 * H:128 + L + 3 * H].set(p["whn"])
    s = s.at[2 * H, 128 + L + 2 * H:128 + L + 3 * H].set(p["bhn"][0])
    # GRU input-side gates (hidden biases for r/z pre-summed in)
    s = s.at[0:H, 256:256 + H].set(p["wir"])
    s = s.at[0:H, 256 + H:256 + 2 * H].set(p["wiz"])
    s = s.at[0:H, 256 + 2 * H:256 + 3 * H].set(p["win"])
    s = s.at[H, 256:256 + H].set((p["bir"] + p["bhr"])[0])
    s = s.at[H, 256 + H:256 + 2 * H].set((p["biz"] + p["bhz"])[0])
    s = s.at[H, 256 + 2 * H:256 + 3 * H].set(p["bin"][0])
    # out projection
    s = s.at[0:H, 384:384 + V].set(p["wo"])
    s = s.at[H, 384:384 + V].set(p["bo"][0])
    return s


def pack_state(p, hidden, encoder_outputs):
    """(L+1, H): rows 0:L = encoder_outputs @ wc_a (once per sequence), row L = h0."""
    enc_proj = jnp.dot(encoder_outputs[0], p["wc_a"],
                       precision=jax.lax.Precision.HIGHEST)
    return jnp.concatenate([enc_proj, hidden[0]], axis=0).astype(jnp.float32)


@jax.jit
def attn_decoder_decode(emb_table3, w_slab, state, tokens):
    """Runs tokens.shape[0] chained decode steps in a single pallas_call.

    emb_table3: (V, 1, H) embedding table (row DMA'd per step via index_map)
    w_slab:     (KA, 512) packed weights+biases (resident)
    state:      (L+1, H)  [enc_proj ; h0]       (resident)
    tokens:     (T,) int32 token ids            (scalar-prefetched to SMEM)
    """
    steps = tokens.shape[0]
    grid_spec = pltpu.PrefetchScalarGridSpec(
        num_scalar_prefetch=1,
        grid=(steps,),
        in_specs=[
            # per-step embedding row selected by the prefetched token id
            pl.BlockSpec((1, 1, H), lambda t, toks: (toks[t], 0, 0)),
            # constant index_map -> loaded once, resident in VMEM across all steps
            pl.BlockSpec((KA, W_LANES), lambda t, toks: (0, 0)),
            pl.BlockSpec((L + 1, H), lambda t, toks: (0, 0)),
        ],
        # whole (T, 128) output resident; kernel writes one lane-dense row per step
        out_specs=pl.BlockSpec((steps, OUT_W), lambda t, toks: (0, 0)),
        scratch_shapes=[pltpu.VMEM((1, H), jnp.float32)],   # hidden-state carry
    )
    out = pl.pallas_call(
        _attn_decoder_kernel,
        out_shape=jax.ShapeDtypeStruct((steps, OUT_W), jnp.float32),
        grid_spec=grid_spec,
        compiler_params=pltpu.CompilerParams(dimension_semantics=("arbitrary",)),
    )(tokens.astype(jnp.int32), emb_table3, w_slab, state)
    logp = out[:, 0:V]            # (T, V)  per-step log-probs
    h_all = out[:, V:V + H]       # (T, H)  per-step hidden states
    attn_w = out[:, V + H:V + H + L]  # (T, L) per-step attention weights
    return logp, h_all, attn_w


# ---------------- pure-JAX reference (mirrors the PyTorch forward, GRU, eval) --------
def reference_forward(params, token, hidden, encoder_outputs):
    dot = functools.partial(jnp.dot, precision=jax.lax.Precision.HIGHEST)
    emb = params["emb"][token][0]                   # (1, H)
    h = hidden[0]                                   # (1, H)
    attn_logits = dot(emb, params["wa_e"]) + dot(h, params["wa_h"]) + params["ba"]
    attn_w = jax.nn.softmax(attn_logits, axis=1)
    attn_applied = dot(attn_w, encoder_outputs[0])
    x = jax.nn.relu(dot(emb, params["wc_e"]) + dot(attn_applied, params["wc_a"]) + params["bc"])
    r = jax.nn.sigmoid(dot(x, params["wir"]) + params["bir"] + dot(h, params["whr"]) + params["bhr"])
    z = jax.nn.sigmoid(dot(x, params["wiz"]) + params["biz"] + dot(h, params["whz"]) + params["bhz"])
    n = jnp.tanh(dot(x, params["win"]) + params["bin"] + r * (dot(h, params["whn"]) + params["bhn"]))
    h_new = (1.0 - z) * n + z * h
    logits = dot(h_new, params["wo"]) + params["bo"]
    return jax.nn.log_softmax(logits, axis=1), h_new[None], attn_w


def reference_decode(params, tokens, hidden, encoder_outputs):
    logps, hs, attns = [], [], []
    h = hidden
    for t in range(tokens.shape[0]):
        logp, h, aw = reference_forward(params, tokens[t].reshape(1, 1), h, encoder_outputs)
        logps.append(logp); hs.append(h[0]); attns.append(aw)
    return (jnp.concatenate(logps, axis=0),
            jnp.concatenate(hs, axis=0),
            jnp.concatenate(attns, axis=0))


if __name__ == "__main__":
    key = jax.random.PRNGKey(0)
    kp, kt, kh, ke = jax.random.split(key, 4)

    params = init_params(kp)
    tokens = jax.random.randint(kt, (T,), 0, V, dtype=jnp.int32)
    hidden = (0.1 * jax.random.normal(kh, (1, 1, H))).astype(jnp.float32)
    encoder_outputs = (0.1 * jax.random.normal(ke, (1, L, H))).astype(jnp.float32)

    # Packed once per model / once per sequence; amortized over the in-kernel loop.
    w_slab = pack_weights(params)
    state = pack_state(params, hidden, encoder_outputs)
    emb3 = params["emb"].reshape(V, 1, H)

    logp, h_all, attn_w = attn_decoder_decode(emb3, w_slab, state, tokens)
    jax.block_until_ready((logp, h_all, attn_w))

    rl, rh, rw = reference_decode(params, tokens, hidden, encoder_outputs)

    # Tolerance is deliberately wider than the single-step 2e-3: the kernel uses
    # default MXU precision (bf16 passes, f32 accumulate) plus an EUP approx
    # reciprocal in the softmax, and errors compound over T chained GRU steps.
    tol = dict(atol=5e-3, rtol=5e-3)
    assert jnp.allclose(logp, rl, **tol), float(jnp.max(jnp.abs(logp - rl)))
    assert jnp.allclose(h_all, rh, **tol), float(jnp.max(jnp.abs(h_all - rh)))
    assert jnp.allclose(attn_w, rw, **tol), float(jnp.max(jnp.abs(attn_w - rw)))

    print("KERNEL_OK")
</pallas_src>

<mosaic_0001>
module attributes {stable_mosaic.version = 11 : i64} {
  func.func @_attn_decoder_kernel(%arg0: i32, %arg1: memref<4xi32, #tpu.memory_space<smem>>, %arg2: memref<1x1x32xf32, #tpu.memory_space<vmem>>, %arg3: memref<72x512xf32, #tpu.memory_space<vmem>>, %arg4: memref<9x32xf32, #tpu.memory_space<vmem>>, %arg5: memref<4x128xf32, #tpu.memory_space<vmem>>, %arg6: memref<1x32xf32, #tpu.memory_space<vmem>>) attributes {dimension_semantics = [#tpu.dimension_semantics<arbitrary>], iteration_bounds = array<i64: 4>, scalar_prefetch = 1 : i64, scratch_operands = 1 : i64, tpu.core_type = #tpu.core_type<tc>, window_params = [{transform_indices = @transform_0, window_bounds = array<i64: 1, 1, 32>}, {pipeline_mode = #tpu.pipeline_mode<synchronous>, transform_indices = @transform_1, window_bounds = array<i64: 72, 512>}, {pipeline_mode = #tpu.pipeline_mode<synchronous>, transform_indices = @transform_2, window_bounds = array<i64: 9, 32>}, {pipeline_mode = #tpu.pipeline_mode<synchronous>, transform_indices = @transform_3, window_bounds = array<i64: 4, 128>}]} {
    %c0_i32 = arith.constant 0 : i32
    %0 = arith.cmpi eq, %arg0, %c0_i32 : i32
    %1 = arith.extui %0 : i1 to i32
    %c0_i32_0 = arith.constant 0 : i32
    %2 = arith.cmpi ne, %1, %c0_i32_0 : i32
    scf.if %2 {
      %c8 = arith.constant 8 : index
      %c0_27 = arith.constant 0 : index
      %84 = vector.load %arg4[%c8, %c0_27] : memref<9x32xf32, #tpu.memory_space<vmem>>, vector<1x32xf32>
      %c0_28 = arith.constant 0 : index
      %c0_29 = arith.constant 0 : index
      %85 = vector.load %arg6[%c0_28, %c0_29] : memref<1x32xf32, #tpu.memory_space<vmem>>, vector<1x32xf32>
      tpu.vector_store %arg6[%c0_28, %c0_29], %84 {strides = array<i32>} : memref<1x32xf32, #tpu.memory_space<vmem>>, vector<1x32xf32>,
    } else {
    }
    %c0 = arith.constant 0 : index
    %c0_1 = arith.constant 0 : index
    %c0_2 = arith.constant 0 : index
    %3 = vector.load %arg2[%c0, %c0_1, %c0_2] : memref<1x1x32xf32, #tpu.memory_space<vmem>>, vector<1x1x32xf32>
    %4 = vector.shape_cast %3 : vector<1x1x32xf32> to vector<1x32xf32>
    %c0_3 = arith.constant 0 : index
    %c0_4 = arith.constant 0 : index
    %5 = vector.load %arg6[%c0_3, %c0_4] : memref<1x32xf32, #tpu.memory_space<vmem>>, vector<1x32xf32>
    %c0_5 = arith.constant 0 : index
    %c0_6 = arith.constant 0 : index
    %6 = vector.load %arg4[%c0_5, %c0_6] : memref<9x32xf32, #tpu.memory_space<vmem>>, vector<8x32xf32>
    %7 = tpu.iota {dimensions = array<i32: 1>} : vector<1x8xi32>
    %c0_i32_7 = arith.constant 0 : i32
    %8 = vector.broadcast %c0_i32_7 : i32 to vector<1x8xi32>
    %9 = arith.cmpi eq, %7, %8 : vector<1x8xi32>
    %10 = arith.extui %9 : vector<1x8xi1> to vector<1x8xi32>
    %11 = arith.sitofp %10 : vector<1x8xi32> to vector<1x8xf32>
    %12 = tpu.concatenate %4, %5, %11 in 1 : vector<1x32xf32>, vector<1x32xf32>, vector<1x8xf32> -> vector<1x72xf32>
    %c0_8 = arith.constant 0 : index
    %c0_9 = arith.constant 0 : index
    %13 = vector.load %arg3[%c0_8, %c0_9] : memref<72x512xf32, #tpu.memory_space<vmem>>, vector<72x256xf32>
    %cst = arith.constant dense<0.000000e+00> : vector<1x256xf32>
    %14 = tpu.matmul %12, %13, %cst {dimension_numbers = #tpu.dot_dimension_numbers<[1], [0], [0], [1], [0, 0, 1, 1], [], []>} : vector<1x72xf32>, vector<72x256xf32>, vector<1x256xf32> -> vector<1x256xf32>
    %15 = vector.extract_strided_slice %14 {offsets = [0, 0], sizes = [1, 128], strides = [1, 1]} : vector<1x256xf32> to vector<1x128xf32>
    %16 = vector.extract_strided_slice %14 {offsets = [0, 128], sizes = [1, 128], strides = [1, 1]} : vector<1x256xf32> to vector<1x128xf32>
    %17 = vector.extract_strided_slice %15 {offsets = [0, 0], sizes = [1, 8], strides = [1, 1]} : vector<1x128xf32> to vector<1x8xf32>
    %18 = vector.extract_strided_slice %16 {offsets = [0, 0], sizes = [1, 8], strides = [1, 1]} : vector<1x128xf32> to vector<1x8xf32>
    %19 = arith.addf %17, %18 : vector<1x8xf32>
    %cst_10 = arith.constant dense<0xFF800000> : vector<1xf32>
    %20 = vector.multi_reduction <maximumf>, %19, %cst_10 [1] : vector<1x8xf32> to vector<1xf32>
    %21 = vector.shape_cast %20 : vector<1xf32> to vector<1x1xf32>
    %22 = vector.broadcast %21 : vector<1x1xf32> to vector<1x8xf32>
    %23 = arith.subf %19, %22 : vector<1x8xf32>
    %24 = math.exp %23 : vector<1x8xf32>
    %cst_11 = arith.constant dense<0.000000e+00> : vector<1xf32>
    %25 = vector.multi_reduction <add>, %24, %cst_11 [1] : vector<1x8xf32> to vector<1xf32>
    %26 = vector.shape_cast %25 : vector<1xf32> to vector<1x1xf32>
    %27 = tpu.reciprocal %26 {approx = true} : vector<1x1xf32> -> vector<1x1xf32>
    %28 = vector.broadcast %27 : vector<1x1xf32> to vector<1x8xf32>
    %29 = arith.mulf %24, %28 : vector<1x8xf32>
    %30 = vector.extract_strided_slice %15 {offsets = [0, 8], sizes = [1, 32], strides = [1, 1]} : vector<1x128xf32> to vector<1x32xf32>
    %cst_12 = arith.constant dense<0.000000e+00> : vector<1x32xf32>
    %31 = tpu.matmul %29, %6, %cst_12 {dimension_numbers = #tpu.dot_dimension_numbers<[1], [0], [0], [1], [0, 0, 1, 1], [], []>} : vector<1x8xf32>, vector<8x32xf32>, vector<1x32xf32> -> vector<1x32xf32>
    %32 = arith.addf %30, %31 : vector<1x32xf32>
    %cst_13 = arith.constant 0.000000e+00 : f32
    %33 = vector.broadcast %cst_13 : f32 to vector<1x32xf32>
    %34 = arith.maximumf %32, %33 : vector<1x32xf32>
    %35 = tpu.concatenate %34, %11 in 1 : vector<1x32xf32>, vector<1x8xf32> -> vector<1x40xf32>
    %c0_14 = arith.constant 0 : index
    %c256 = arith.constant 256 : index
    %36 = vector.load %arg3[%c0_14, %c256] : memref<72x512xf32, #tpu.memory_space<vmem>>, vector<40x128xf32>
    %cst_15 = arith.constant dense<0.000000e+00> : vector<1x128xf32>
    %37 = tpu.matmul %35, %36, %cst_15 {dimension_numbers = #tpu.dot_dimension_numbers<[1], [0], [0], [1], [0, 0, 1, 1], [], []>} : vector<1x40xf32>, vector<40x128xf32>, vector<1x128xf32> -> vector<1x128xf32>
    %38 = vector.extract_strided_slice %37 {offsets = [0, 0], sizes = [1, 32], strides = [1, 1]} : vector<1x128xf32> to vector<1x32xf32>
    %39 = vector.extract_strided_slice %16 {offsets = [0, 8], sizes = [1, 32], strides = [1, 1]} : vector<1x128xf32> to vector<1x32xf32>
    %40 = arith.addf %38, %39 : vector<1x32xf32>
    %41 = arith.negf %40 : vector<1x32xf32>
    %42 = math.exp %41 : vector<1x32xf32>
    %cst_16 = arith.constant 1.000000e+00 : f32
    %43 = vector.broadcast %cst_16 : f32 to vector<1x32xf32>
    %44 = arith.addf %43, %42 : vector<1x32xf32>
    %45 = arith.divf %43, %44 : vector<1x32xf32>
    %46 = vector.extract_strided_slice %37 {offsets = [0, 32], sizes = [1, 32], strides = [1, 1]} : vector<1x128xf32> to vector<1x32xf32>
    %47 = vector.extract_strided_slice %16 {offsets = [0, 40], sizes = [1, 32], strides = [1, 1]} : vector<1x128xf32> to vector<1x32xf32>
    %48 = arith.addf %46, %47 : vector<1x32xf32>
    %49 = arith.negf %48 : vector<1x32xf32>
    %50 = math.exp %49 : vector<1x32xf32>
    %cst_17 = arith.constant 1.000000e+00 : f32
    %51 = vector.broadcast %cst_17 : f32 to vector<1x32xf32>
    %52 = arith.addf %51, %50 : vector<1x32xf32>
    %53 = arith.divf %51, %52 : vector<1x32xf32>
    %54 = vector.extract_strided_slice %37 {offsets = [0, 64], sizes = [1, 32], strides = [1, 1]} : vector<1x128xf32> to vector<1x32xf32>
    %55 = vector.extract_strided_slice %16 {offsets = [0, 72], sizes = [1, 32], strides = [1, 1]} : vector<1x128xf32> to vector<1x32xf32>
    %56 = arith.mulf %45, %55 : vector<1x32xf32>
    %57 = arith.addf %54, %56 : vector<1x32xf32>
    %58 = math.tanh %57 : vector<1x32xf32>
    %cst_18 = arith.constant 1.000000e+00 : f32
    %59 = vector.broadcast %cst_18 : f32 to vector<1x32xf32>
    %60 = arith.subf %59, %53 : vector<1x32xf32>
    %61 = arith.mulf %60, %58 : vector<1x32xf32>
    %62 = arith.mulf %53, %5 : vector<1x32xf32>
    %63 = arith.addf %61, %62 : vector<1x32xf32>
    %c0_19 = arith.constant 0 : index
    %c0_20 = arith.constant 0 : index
    %64 = vector.load %arg6[%c0_19, %c0_20] : memref<1x32xf32, #tpu.memory_space<vmem>>, vector<1x32xf32>
    tpu.vector_store %arg6[%c0_19, %c0_20], %63 {strides = array<i32>} : memref<1x32xf32, #tpu.memory_space<vmem>>, vector<1x32xf32>,
    %65 = tpu.concatenate %63, %11 in 1 : vector<1x32xf32>, vector<1x8xf32> -> vector<1x40xf32>
    %c0_21 = arith.constant 0 : index
    %c384 = arith.constant 384 : index
    %66 = vector.load %arg3[%c0_21, %c384] : memref<72x512xf32, #tpu.memory_space<vmem>>, vector<40x128xf32>
    %cst_22 = arith.constant dense<0.000000e+00> : vector<1x128xf32>
    %67 = tpu.matmul %65, %66, %cst_22 {dimension_numbers = #tpu.dot_dimension_numbers<[1], [0], [0], [1], [0, 0, 1, 1], [], []>} : vector<1x40xf32>, vector<40x128xf32>, vector<1x128xf32> -> vector<1x128xf32>
    %68 = vector.extract_strided_slice %67 {offsets = [0, 0], sizes = [1, 64], strides = [1, 1]} : vector<1x128xf32> to vector<1x64xf32>
    %cst_23 = arith.constant dense<0xFF800000> : vector<1xf32>
    %69 = vector.multi_reduction <maximumf>, %68, %cst_23 [1] : vector<1x64xf32> to vector<1xf32>
    %70 = vector.shape_cast %69 : vector<1xf32> to vector<1x1xf32>
    %71 = vector.broadcast %70 : vector<1x1xf32> to vector<1x64xf32>
    %72 = arith.subf %68, %71 : vector<1x64xf32>
    %73 = math.exp %72 : vector<1x64xf32>
    %cst_24 = arith.constant dense<0.000000e+00> : vector<1xf32>
    %74 = vector.multi_reduction <add>, %73, %cst_24 [1] : vector<1x64xf32> to vector<1xf32>
    %75 = vector.shape_cast %74 : vector<1xf32> to vector<1x1xf32>
    %76 = math.log %75 : vector<1x1xf32>
    %77 = arith.addf %76, %70 : vector<1x1xf32>
    %78 = vector.broadcast %77 : vector<1x1xf32> to vector<1x64xf32>
    %79 = arith.subf %68, %78 : vector<1x64xf32>
    %cst_25 = arith.constant 0.000000e+00 : f32
    %80 = vector.broadcast %cst_25 : f32 to vector<1x24xf32>
    %81 = tpu.concatenate %79, %63, %29, %80 in 1 : vector<1x64xf32>, vector<1x32xf32>, vector<1x8xf32>, vector<1x24xf32> -> vector<1x128xf32>
    %82 = arith.index_cast %arg0 : i32 to index
    %c0_26 = arith.constant 0 : index
    %83 = vector.load %arg5[%82, %c0_26] : memref<4x128xf32, #tpu.memory_space<vmem>>, vector<1x128xf32>
    tpu.vector_store %arg5[%82, %c0_26], %81 {strides = array<i32>} : memref<4x128xf32, #tpu.memory_space<vmem>>, vector<1x128xf32>,
    return
  }
  func.func @transform_0(%arg0: i32, %arg1: memref<4xi32, #tpu.memory_space<smem>>) -> (i32, i32, i32) {
    %0 = arith.index_cast %arg0 : i32 to index
    %1 = memref.load %arg1[%0] : memref<4xi32, #tpu.memory_space<smem>>
    %c0_i32 = arith.constant 0 : i32
    %c0_i32_0 = arith.constant 0 : i32
    %c0_i32_1 = arith.constant 0 : i32
    return %1, %c0_i32, %c0_i32_0 : i32, i32, i32
  }
  func.func @transform_1(%arg0: i32, %arg1: memref<4xi32, #tpu.memory_space<smem>>) -> (i32, i32) {
    %c0_i32 = arith.constant 0 : i32
    %c0_i32_0 = arith.constant 0 : i32
    %c0_i32_1 = arith.constant 0 : i32
    return %c0_i32, %c0_i32_0 : i32, i32
  }
  func.func @transform_2(%arg0: i32, %arg1: memref<4xi32, #tpu.memory_space<smem>>) -> (i32, i32) {
    %c0_i32 = arith.constant 0 : i32
    %c0_i32_0 = arith.constant 0 : i32
    %c0_i32_1 = arith.constant 0 : i32
    return %c0_i32, %c0_i32_0 : i32, i32
  }
  func.func @transform_3(%arg0: i32, %arg1: memref<4xi32, #tpu.memory_space<smem>>) -> (i32, i32) {
    %c0_i32 = arith.constant 0 : i32
    %c0_i32_0 = arith.constant 0 : i32
    %c0_i32_1 = arith.constant 0 : i32
    return %c0_i32, %c0_i32_0 : i32, i32
  }
}

</mosaic_0001>

<llo_original>
// kernel: attn_decoder_decode.1
$region0: #{attn_decoder_decode.1}
  #allocation0 [shape = 'u32[]', space=smem, size = 0x4, offset = 0x4, fixed_abs, tag = 'smem constant byte address 0x4 - core index']
  #allocation1 [shape = 'u32[72,128]{1,0:T(1,128)}', space=vmem, size = 0x9000, scoped, tag = 'internal scratch']
  #allocation2 [shape = 'f32[1,32]{1,0:T(1,128)}', space=vmem, size = 0x200, scoped, tag = 'scratch operand']
  #allocation3 [shape = 's32[1]{0}', space=sflag, size = 0x4, scoped, tag = 'scoped memory for attn_decoder_decode.1']
  #allocation4 [shape = 'u8[512]{0}', space=smem, size = 0x200, scoped, tag = 'prefetched SMEM operand 0']
  %s0 = inlined_call_operand.vmem [shape: s32[4], index: 0, kind: input, shape index: {}]
  %s1 = inlined_call_operand.vmem [shape: f32[64,1,32], index: 1, kind: input, shape index: {}]
  %s2 = inlined_call_operand.hbm [shape: f32[72,512], index: 2, kind: input, shape index: {}]
  %s3 = inlined_call_operand.vmem [shape: f32[9,32], index: 3, kind: input, shape index: {}]
  %s4 = inlined_call_operand.vmem [shape: f32[4,128], index: 4, kind: output, shape index: {}]
  %s5 = sld [smem:[#allocation0]]
  $region53: #{attn_decoder_decode.1} parent=0
    _
  %s7 = ssub.s32 1, %s5
  %s8 = scalar_select 0, %s7, %s5
  %s10 = sshll.u32 %s0, 4
  %s11 = int_to_ptr.vmem [resolvable:$true] %s10
  %13 = dma.vmem_to_smem %s11, 16, [#allocation4], [#allocation3]
  %15 = dma.done [#allocation3], 16
  %16 = sfence
  $region1: #{attn_decoder_decode.1} parent=0
    #allocation5 [shape = 'u8[147456]{0}', space=vmem, size = 0x24000, scoped, tag = 'input window, operand 2, single buffered']
    #allocation6 [shape = 's32[2]{0}', space=sflag, size = 0x8, scoped, tag = 'scoped memory for attn_decoder_decode.1']
    %17 = vsyncpa [#allocation6], 0
    loop: start=0, step=1, limit=6
    $region2: #{attn_decoder_decode.1} parent=1 // loop_pre_header
      _
    $region3: #{attn_decoder_decode.1} parent=1 // loop_header
      %s19 = sphi 0, %s23
      %p20 = scmp.ge.s32.totalorder %s19, 6
      %s31 = sphi 0, %s33
      %s34 = sphi 0, %s31
      %s35 = sphi 0, %s34
      %s51 = sphi 0, %s35
      %s55 = sphi 0, %s55
      %s57 = sphi 0, %s55
      %s58 = sphi 0, %s57
      %s72 = sphi 0, %s58
      %s76 = sphi 0, %s76
      %s78 = sphi 0, %s76
      %s79 = sphi 0, %s78
      %s93 = sphi 0, %s79
      %s97 = sphi 0, %s97
      %s99 = sphi 0, %s97
      %s100 = sphi 0, %s99
      %s114 = sphi 0, %s100
    $region4: #{attn_decoder_decode.1} parent=1 // loop_header_branch
      %22 = sbr.rel (%p20) target = $region8
    $region5: #{attn_decoder_decode.1} parent=1 // loop_body
      %s24 = ssub.s32 %s19, 1
      %s25 = ssub.s32 %s19, 2
      %s26 = sadd.s32 %s19, 1
      %s27 = sld [smem:[#allocation4 + %s19]]
      %s28 = sld [smem:[#allocation4 + %s26]]
      %s29 = ssub.s32 %s27, %s28
      %p30 = scmp.eq.s32.totalorder %s29, 0
      %s32 = sadd.s32 %s31, 1
      %s33 = scalar_select %p30, %s31, %s32
      %p36 = pneg %p30
      %p37 = scmp.eq.s32.totalorder %s19, 3
      %p38 = por %p36, %p37
      %p39 = scmp.ne.s32.totalorder %s31, %s34
      %p40 = scmp.eq.s32.totalorder %s19, 0
      %p41 = por %p39, %p40
      %p42 = scmp.ne.s32.totalorder %s31, %s34
      %p43 = scmp.eq.s32.totalorder %s24, 3
      %p44 = por %p42, %p43
      %p45 = scmp.ne.s32.totalorder %s34, %s35
      %p46 = scmp.eq.s32.totalorder %s24, 0
      %p47 = por %p45, %p46
      %p48 = scmp.ne.s32.totalorder %s34, %s35
      %p49 = scmp.eq.s32.totalorder %s25, 3
      %p50 = por %p48, %p49
      %p52 = scmp.ne.s32.totalorder %s35, %s51
      %p53 = scmp.eq.s32.totalorder %s25, 0
      %p54 = por %p52, %p53
      %s56 = sadd.s32 %s55, 1
      %p59 = scmp.eq.s32.totalorder %s19, 3
      %p60 = scmp.ne.s32.totalorder %s55, %s57
      %p61 = scmp.eq.s32.totalorder %s19, 0
      %p62 = por %p60, %p61
      %p63 = scmp.ne.s32.totalorder %s55, %s57
      %p64 = scmp.eq.s32.totalorder %s24, 3
      %p65 = por %p63, %p64
      %p66 = scmp.ne.s32.totalorder %s57, %s58
      %p67 = scmp.eq.s32.totalorder %s24, 0
      %p68 = por %p66, %p67
      %p69 = scmp.ne.s32.totalorder %s57, %s58
      %p70 = scmp.eq.s32.totalorder %s25, 3
      %p71 = por %p69, %p70
      %p73 = scmp.ne.s32.totalorder %s58, %s72
      %p74 = scmp.eq.s32.totalorder %s25, 0
      %p75 = por %p73, %p74
      %s77 = sadd.s32 %s76, 1
      %p80 = scmp.eq.s32.totalorder %s19, 3
      %p81 = scmp.ne.s32.totalorder %s76, %s78
      %p82 = scmp.eq.s32.totalorder %s19, 0
      %p83 = por %p81, %p82
      %p84 = scmp.ne.s32.totalorder %s76, %s78
      %p85 = scmp.eq.s32.totalorder %s24, 3
      %p86 = por %p84, %p85
      %p87 = scmp.ne.s32.totalorder %s78, %s79
      %p88 = scmp.eq.s32.totalorder %s24, 0
      %p89 = por %p87, %p88
      %p90 = scmp.ne.s32.totalorder %s78, %s79
      %p91 = scmp.eq.s32.totalorder %s25, 3
      %p92 = por %p90, %p91
      %p94 = scmp.ne.s32.totalorder %s79, %s93
      %p95 = scmp.eq.s32.totalorder %s25, 0
      %p96 = por %p94, %p95
      %s98 = sadd.s32 %s97, 1
      %p101 = scmp.eq.s32.totalorder %s19, 3
      %p102 = scmp.ne.s32.totalorder %s97, %s99
      %p103 = scmp.eq.s32.totalorder %s19, 0
      %p104 = por %p102, %p103
      %p105 = scmp.ne.s32.totalorder %s97, %s99
      %p106 = scmp.eq.s32.totalorder %s24, 3
      %p107 = por %p105, %p106
      %p108 = scmp.ne.s32.totalorder %s99, %s100
      %p109 = scmp.eq.s32.totalorder %s24, 0
      %p110 = por %p108, %p109
      %p111 = scmp.ne.s32.totalorder %s99, %s100
      %p112 = scmp.eq.s32.totalorder %s25, 3
      %p113 = por %p111, %p112
      %p115 = scmp.ne.s32.totalorder %s100, %s114
      %p116 = scmp.eq.s32.totalorder %s25, 0
      %p117 = por %p115, %p116
      %p118 = scmp.le.s32.totalorder 1, %s19
      %p119 = scmp.lt.s32.totalorder %s19, 5
      %p120 = pnand %p118, %p119
      %p121 = pneg %p120
      // Predicated region
      $region9: #{attn_decoder_decode.1} parent=5 // pred_check
        _
      $region10: #{attn_decoder_decode.1} parent=5 // pred_check_branch
        %123 = sbr.rel (%p120) target = $region12
      $region11: #{attn_decoder_decode.1} parent=5 // pred_region
        %s124 = ssub.s32 %s19, 1
        // Predicated region
        $region13: #{attn_decoder_decode.1} parent=11 // pred_check
          %p125 = pneg %p68
        $region14: #{attn_decoder_decode.1} parent=11 // pred_check_branch
          %127 = sbr.rel (%p125) target = $region16
        $region15: #{attn_decoder_decode.1} parent=11 // pred_region
          %129 = vsyncadd [#allocation6], 0
          %s130 = sshll.u32 %s2, 4
          %s131 = int_to_ptr.hbm [resolvable:$true] %s130
          %s132 = sshll.u32 [#allocation5], 4
          %s133 = int_to_ptr.vmem [resolvable:$true] %s132
          %138 = dma.hbm_to_vmem [thread:$0]  %s131, 4608, %s133, [#allocation6], 512, 512, 32
        $region16: #{attn_decoder_decode.1} parent=11 // pred_fallthru
          _
        // Predicated region
        $region17: #{attn_decoder_decode.1} parent=11 // pred_check
          %p139 = pneg %p89
        $region18: #{attn_decoder_decode.1} parent=11 // pred_check_branch
          %141 = sbr.rel (%p139) target = $region20
        $region19: #{attn_decoder_decode.1} parent=11 // pred_region
          _
        $region20: #{attn_decoder_decode.1} parent=11 // pred_fallthru
          _
      $region12: #{attn_decoder_decode.1} parent=5 // pred_fallthru
        _
      %p142 = scmp.lt.s32.totalorder %s19, 4
      // Predicated region
      $region21: #{attn_decoder_decode.1} parent=5 // pred_check
        %p143 = pneg %p142
      $region22: #{attn_decoder_decode.1} parent=5 // pred_check_branch
        %145 = sbr.rel (%p143) target = $region24
      $region23: #{attn_decoder_decode.1} parent=5 // pred_region
        // Predicated region
        $region25: #{attn_decoder_decode.1} parent=23 // pred_check
          %p146 = pneg %p41
        $region26: #{attn_decoder_decode.1} parent=23 // pred_check_branch
          %148 = sbr.rel (%p146) target = $region28
        $region27: #{attn_decoder_decode.1} parent=23 // pred_region
          %s149 = sld [smem:[#allocation4 + %s19]]
          %p150 = scmp.lt.s32.totalorder %s149, 63
          %s151 = scalar_select %p150, %s149, 63
          %s152 = scalar_lea.vmem %s1, %s151
          %s153 = sld [smem:[#allocation4 + %s19]]
        $region28: #{attn_decoder_decode.1} parent=23 // pred_fallthru
          _
      $region24: #{attn_decoder_decode.1} parent=5 // pred_fallthru
        _
      %p154 = scmp.le.s32.totalorder 1, %s19
      %p155 = scmp.lt.s32.totalorder %s19, 5
      %p156 = pnand %p154, %p155
      %p157 = pneg %p156
      // Predicated region
      $region29: #{attn_decoder_decode.1} parent=5 // pred_check
        _
      $region30: #{attn_decoder_decode.1} parent=5 // pred_check_branch
        %159 = sbr.rel (%p156) target = $region32
      $region31: #{attn_decoder_decode.1} parent=5 // pred_region
        %s160 = ssub.s32 %s19, 1
        // Predicated region
        $region33: #{attn_decoder_decode.1} parent=31 // pred_check
          %p161 = pneg %p68
        $region34: #{attn_decoder_decode.1} parent=31 // pred_check_branch
          %163 = sbr.rel (%p161) target = $region36
        $region35: #{attn_decoder_decode.1} parent=31 // pred_region
          %165 = dma.done [#allocation6], 4608
        $region36: #{attn_decoder_decode.1} parent=31 // pred_fallthru
          _
        %s166 = sld [smem:[#allocation4 + %s24]]
        %p167 = scmp.lt.s32.totalorder %s166, 63
        %s168 = scalar_select %p167, %s166, 63
        %s169 = scalar_lea.vmem %s1, %s168
        %p170 = pneg %p47
        %p171 = pneg %p44
        %p172 = pneg %p68
        %p173 = pneg %p65
        %p174 = pneg %p89
        %p175 = pneg %p86
        %p176 = pneg %p110
        %p177 = pneg %p107
        %s178 = sld [smem:[#allocation4 + %s24]]
        %p179 = scmp.lt.s32.totalorder %s178, 63
        %s180 = scalar_select %p179, %s178, 63
        %s181 = scalar_lea.vmem %s1, %s180
        %s182 = sld [smem:[#allocation4 + %s24]]
        %p183 = scmp.eq.s32.totalorder %s24, 0
        // Predicated region
        $region37: #{attn_decoder_decode.1} parent=31 // pred_check
          %p184 = pneg %p183
        $region38: #{attn_decoder_decode.1} parent=31 // pred_check_branch
          %186 = sbr.rel (%p184) target = $region40
        $region39: #{attn_decoder_decode.1} parent=31 // pred_region
          %v187 = vld [vmem:[%s3 + $0x8] sm:$0x1]
          %vm188 = vcmask 253952
          %189 = vst.msk [vmem:[#allocation2] sm:$0x1] %vm188, %v187
        $region40: #{attn_decoder_decode.1} parent=31 // pred_fallthru
          _
        %v190 = vld [vmem:[%s181] sm:$0x1]
        %v191 = vld [vmem:[#allocation2] sm:$0x1]
        %v192 = vld [vmem:[%s3] sm:$0xff]
        %v193 = vlaneseq
        %v194 = vand.u32 %v193, 127
        %vm195 = vcmp.eq.s32.totalorder %v194, 0
        %v196 = vsel %vm195, 1, 0
        %v197 = vcvt.s32.f32 %v196
        %v199 = vperm.slane %v191, 0
        %200 = vrot.lane.b32.xlu0 %v199, 32
        %v201 = vpop.permute.xlu0 %200
        %204 = vrot.lane.b32.xlu0 %v197, 64
        %v205 = vpop.permute.xlu0 %204
        %vm207 = vcmask 261120
        %v208 = vsel %vm207, %v190, %v201
        %vm209 = vcmask 523264
        %v210 = vsel %vm209, %v208, %v205
        %v211 = vld [vmem:[#allocation5] sm:$0xff]
        %v212 = vld [vmem:[#allocation5 + $0x8] sm:$0xff]
        %v213 = vld [vmem:[#allocation5 + $0x20] sm:$0xff]
        %v214 = vld [vmem:[#allocation5 + $0x28] sm:$0xff]
        %v215 = vld [vmem:[#allocation5 + $0x40] sm:$0xff]
        %v216 = vld [vmem:[#allocation5 + $0x48] sm:$0xff]
        %v217 = vld [vmem:[#allocation5 + $0x60] sm:$0xff]
        %v218 = vld [vmem:[#allocation5 + $0x68] sm:$0xff]
        %v219 = vld [vmem:[#allocation5 + $0x80] sm:$0xff]
        %v220 = vld [vmem:[#allocation5 + $0x88] sm:$0xff]
        %v221 = vld [vmem:[#allocation5 + $0xa0] sm:$0xff]
        %v222 = vld [vmem:[#allocation5 + $0xa8] sm:$0xff]
        %v223 = vld [vmem:[#allocation5 + $0xc0] sm:$0xff]
        %v224 = vld [vmem:[#allocation5 + $0xc8] sm:$0xff]
        %v225 = vld [vmem:[#allocation5 + $0xe0] sm:$0xff]
        %v226 = vld [vmem:[#allocation5 + $0xe8] sm:$0xff]
        %v227 = vld [vmem:[#allocation5 + $0x100] sm:$0xff]
        %v228 = vld [vmem:[#allocation5 + $0x108] sm:$0xff]
        %vm229 = vcmask 588800
        %v231 = vsel %vm229, %v210, 0
        %233 = vmatpush.msra.mxu0 0.0
        %234 = vmatpush.msra.mxu0 0.0
        %235 = vmatpush.msra.mxu0 0.0
        %236 = vmatpush.msra.mxu0 0.0
        %237 = vmatpush.msra.mxu0 0.0
        %238 = vmatpush.msra.mxu0 0.0
        %239 = vmatpush.msra.mxu0 0.0
        %240 = vmatpush.msra.mxu0 %v227
        %241 = vmatpush.msra.mxu0 %v225
        %242 = vmatpush.msra.mxu0 %v223
        %243 = vmatpush.msra.mxu0 %v221
        %244 = vmatpush.msra.mxu0 %v219
        %245 = vmatpush.msra.mxu0 %v217
        %246 = vmatpush.msra.mxu0 %v215
        %247 = vmatpush.msra.mxu0 %v213
        %248 = vmatpush.msra.mxu0 %v211
        %249 = vmatmul.f32.gmra.mxu0 %v231
        %v250 = vpop.f32.mrf.mxu0
        %v251 = vadd.f32 0.0, %v250
        %252 = vdwg.mxu0
        %253 = vmatpush.msra.mxu0 0.0
        %254 = vmatpush.msra.mxu0 0.0
        %255 = vmatpush.msra.mxu0 0.0
        %256 = vmatpush.msra.mxu0 0.0
        %257 = vmatpush.msra.mxu0 0.0
        %258 = vmatpush.msra.mxu0 0.0
        %259 = vmatpush.msra.mxu0 0.0
        %260 = vmatpush.msra.mxu0 %v228
        %261 = vmatpush.msra.mxu0 %v226
        %262 = vmatpush.msra.mxu0 %v224
        %263 = vmatpush.msra.mxu0 %v222
        %264 = vmatpush.msra.mxu0 %v220
        %265 = vmatpush.msra.mxu0 %v218
        %266 = vmatpush.msra.mxu0 %v216
        %267 = vmatpush.msra.mxu0 %v214
        %268 = vmatpush.msra.mxu0 %v212
        %269 = vmatmul.f32.gmra.mxu0 %v231
        %v270 = vpop.f32.mrf.mxu0
        %v271 = vadd.f32 0.0, %v270
        %272 = vdwg.mxu0
        %v273 = vadd.f32 %v251, %v271
        %vm274 = vcmask 57344
        %v275 = vsel %vm274, %v273, -inf
        %276 = vmax.xlane.f32.xlu0 %v275
        %v277 = vpop.xlane.xlu0 %276
        %v278 = vsub.f32 %v273, %v277
        %v279 = vmul.f32 %v278, 1.442695
        %v280 = vpow.pop %v279
        %v281 = vsel %vm274, %v280, 0.0
        %282 = vadd.xlane.f32.xlu0 %v281
        %v283 = vpop.xlane.xlu0 %282
        %v284 = vrcp.pop %v283
        %v285 = vmul.f32 %v280, %v284
        %vm286 = vcmask 64512
        %v288 = vsel %vm286, %v285, 0
        %290 = vmatpush.msra.mxu0 0.0
        %291 = vmatpush.msra.mxu0 0.0
        %292 = vmatpush.msra.mxu0 0.0
        %293 = vmatpush.msra.mxu0 0.0
        %294 = vmatpush.msra.mxu0 0.0
        %295 = vmatpush.msra.mxu0 0.0
        %296 = vmatpush.msra.mxu0 0.0
        %297 = vmatpush.msra.mxu0 0.0
        %298 = vmatpush.msra.mxu0 0.0
        %299 = vmatpush.msra.mxu0 0.0
        %300 = vmatpush.msra.mxu0 0.0
        %301 = vmatpush.msra.mxu0 0.0
        %302 = vmatpush.msra.mxu0 0.0
        %303 = vmatpush.msra.mxu0 0.0
        %304 = vmatpush.msra.mxu0 0.0
        %305 = vmatpush.msra.mxu0 %v192
        %306 = vmatmul.f32.gmra.mxu0 %v288
        %v307 = vpop.f32.mrf.mxu0
        %v308 = vadd.f32 0.0, %v307
        %309 = vdwg.mxu0
        %311 = vrot.lane.b32.xlu0 %v308, 8
        %v312 = vpop.permute.xlu0 %311
        %v314 = vadd.f32 %v251, %v312
        %v315 = vmax.f32 %v314, 0.0
        %317 = vrot.lane.b32.xlu0 %v315, 120
        %v318 = vpop.permute.xlu0 %317
        %320 = vrot.lane.b32.xlu0 %v197, 32
        %v321 = vpop.permute.xlu0 %320
        %v323 = vsel %vm207, %v318, %v321
        %v324 = vld [vmem:[#allocation5 + $0x10] sm:$0xff]
        %v325 = vld [vmem:[#allocation5 + $0x30] sm:$0xff]
        %v326 = vld [vmem:[#allocation5 + $0x50] sm:$0xff]
        %v327 = vld [vmem:[#allocation5 + $0x70] sm:$0xff]
        %v328 = vld [vmem:[#allocation5 + $0x90] sm:$0xff]
        %vm329 = vcmask 326656
        %v331 = vsel %vm329, %v323, 0
        %333 = vmatpush.msra.mxu0 0.0
        %334 = vmatpush.msra.mxu0 0.0
        %335 = vmatpush.msra.mxu0 0.0
        %336 = vmatpush.msra.mxu0 0.0
        %337 = vmatpush.msra.mxu0 0.0
        %338 = vmatpush.msra.mxu0 0.0
        %339 = vmatpush.msra.mxu0 0.0
        %340 = vmatpush.msra.mxu0 0.0
        %341 = vmatpush.msra.mxu0 0.0
        %342 = vmatpush.msra.mxu0 0.0
        %343 = vmatpush.msra.mxu0 0.0
        %344 = vmatpush.msra.mxu0 %v328
        %345 = vmatpush.msra.mxu0 %v327
        %346 = vmatpush.msra.mxu0 %v326
        %347 = vmatpush.msra.mxu0 %v325
        %348 = vmatpush.msra.mxu0 %v324
        %349 = vmatmul.f32.gmra.mxu0 %v331
        %v350 = vpop.f32.mrf.mxu0
        %v351 = vadd.f32 0.0, %v350
        %352 = vdwg.mxu0
        %354 = vrot.lane.b32.xlu0 %v271, 120
        %v355 = vpop.permute.xlu0 %354
        %v357 = vadd.f32 %v351, %v355
        %v358 = vxor.u32 %v357, 2147483648
        %v359 = vmul.f32 %v358, 1.442695
        %v360 = vpow.pop %v359
        %v361 = vadd.f32 %v360, 1.0
        %v362 = vrcp.pop %v361
        %v363 = vmul.f32 %v361, %v362
        %v364 = vsub.f32 1.0, %v363
        %v365 = vmul.f32 %v362, %v364
        %v366 = vadd.f32 %v362, %v365
        %vm367 = vweird.f32 %v361
        %vm368 = vweird.f32 %v362
        %vm369 = vmor %vm367, %vm368
        %v370 = vsel %vm369, %v362, %v366
        %v371 = vand.u32 2147483647, %v361
        %vm372 = vcmp.eq.f32.partialorder %v371, 8.507059e+37
        %v373 = vand.u32 %v361, 2147483648
        %v374 = vor.u32 1.1754944e-38, %v373
        %v375 = vsel %vm372, %v374, %v370
        %v376 = vmul.f32 1.0, %v375
        %377 = vrot.lane.b32.xlu0 %v271, 56
        %v378 = vpop.permute.xlu0 %377
        %v380 = vmul.f32 %v376, %v378
        %382 = vrot.lane.b32.xlu0 %v380, 64
        %v383 = vpop.permute.xlu0 %382
        %v385 = vadd.f32 %v351, %v383
        %v386 = vtanh.pop %v385
        %v387 = vsub.f32 1.0, %v376
        %389 = vrot.lane.b32.xlu0 %v386, 96
        %v390 = vpop.permute.xlu0 %389
        %v392 = vmul.f32 %v387, %v390
        %v393 = vmul.f32 %v376, %v201
        %v394 = vadd.f32 %v392, %v393
        %396 = vrot.lane.b32.xlu0 %v394, 96
        %v397 = vpop.permute.xlu0 %396
        %vm399 = vcmask 253952
        %400 = vst.msk [vmem:[#allocation2] sm:$0x1] %vm399, %v397
        %v401 = vsel %vm207, %v397, %v321
        %v402 = vld [vmem:[#allocation5 + $0x18] sm:$0xff]
        %v403 = vld [vmem:[#allocation5 + $0x38] sm:$0xff]
        %v404 = vld [vmem:[#allocation5 + $0x58] sm:$0xff]
        %v405 = vld [vmem:[#allocation5 + $0x78] sm:$0xff]
        %v406 = vld [vmem:[#allocation5 + $0x98] sm:$0xff]
        %v408 = vsel %vm329, %v401, 0
        %410 = vmatpush.msra.mxu0 0.0
        %411 = vmatpush.msra.mxu0 0.0
        %412 = vmatpush.msra.mxu0 0.0
        %413 = vmatpush.msra.mxu0 0.0
        %414 = vmatpush.msra.mxu0 0.0
        %415 = vmatpush.msra.mxu0 0.0
        %416 = vmatpush.msra.mxu0 0.0
        %417 = vmatpush.msra.mxu0 0.0
        %418 = vmatpush.msra.mxu0 0.0
        %419 = vmatpush.msra.mxu0 0.0
        %420 = vmatpush.msra.mxu0 0.0
        %421 = vmatpush.msra.mxu0 %v406
        %422 = vmatpush.msra.mxu0 %v405
        %423 = vmatpush.msra.mxu0 %v404
        %424 = vmatpush.msra.mxu0 %v403
        %425 = vmatpush.msra.mxu0 %v402
        %426 = vmatmul.f32.gmra.mxu0 %v408
        %v427 = vpop.f32.mrf.mxu0
        %v428 = vadd.f32 0.0, %v427
        %429 = vdwg.mxu0
        %vm430 = vcmask 516096
        %v431 = vsel %vm430, %v428, -inf
        %432 = vmax.xlane.f32.xlu0 %v431
        %v433 = vpop.xlane.xlu0 %432
        %v434 = vsub.f32 %v428, %v433
        %v435 = vmul.f32 %v434, 1.442695
        %v436 = vpow.pop %v435
        %v437 = vsel %vm430, %v436, 0.0
        %438 = vadd.xlane.f32.xlu0 %v437
        %v439 = vpop.xlane.xlu0 %438
        %v440 = vlog2.pop %v439
        %v441 = vmul.f32 %v440, 0.6931472
        %v442 = vadd.f32 %v441, %v433
        %v443 = vsub.f32 %v428, %v442
        %444 = vrot.lane.b32.xlu0 %v394, 32
        %v445 = vpop.permute.xlu0 %444
        %447 = vrot.lane.b32.xlu0 %v285, 96
        %v448 = vpop.permute.xlu0 %447
        %v450 = vsel %vm209, %v443, %v445
        %vm451 = vcmask 785408
        %v452 = vsel %vm451, %v450, %v448
        %vm453 = vcmask 850944
        %v454 = vsel %vm453, %v452, 0.0
        %s455 = scalar_lea.vmem %s4, %s24
        %456 = vst [vmem:[%s455] sm:$0x1] %v454
        // Predicated region
        $region41: #{attn_decoder_decode.1} parent=31 // pred_check
          %p457 = pneg %p107
        $region42: #{attn_decoder_decode.1} parent=31 // pred_check_branch
          %459 = sbr.rel (%p457) target = $region44
        $region43: #{attn_decoder_decode.1} parent=31 // pred_region
          _
        $region44: #{attn_decoder_decode.1} parent=31 // pred_fallthru
          _
        // Predicated region
        $region45: #{attn_decoder_decode.1} parent=31 // pred_check
          %p460 = pneg %p107
        $region46: #{attn_decoder_decode.1} parent=31 // pred_check_branch
          %462 = sbr.rel (%p460) target = $region48
        $region47: #{attn_decoder_decode.1} parent=31 // pred_region
          _
        $region48: #{attn_decoder_decode.1} parent=31 // pred_fallthru
          _
      $region32: #{attn_decoder_decode.1} parent=5 // pred_fallthru
        _
      %p463 = scmp.le.s32.totalorder 2, %s19
      // Predicated region
      $region49: #{attn_decoder_decode.1} parent=5 // pred_check
        %p464 = pneg %p463
      $region50: #{attn_decoder_decode.1} parent=5 // pred_check_branch
        %466 = sbr.rel (%p464) target = $region52
      $region51: #{attn_decoder_decode.1} parent=5 // pred_region
        %s467 = ssub.s32 %s19, 2
      $region52: #{attn_decoder_decode.1} parent=5 // pred_fallthru
        _
    $region6: #{attn_decoder_decode.1} parent=1 // loop_footer
      %s23 = sadd.s32 1, %s19
    $region7: #{attn_decoder_decode.1} parent=1 // loop_footer_branch
      %18 = sbr.rel target = $region3
    $region8: #{attn_decoder_decode.1} parent=1 // loop_exit
      _
    %468 = vsyncpa [#allocation6], 1
    %s469 = scalar_lea.sflag [#allocation6], 1
    %470 = vsyncpa %s469, 1

</llo_original>
